<compile_context>
chip_gen: v7x
topology: tpu7x:2x2x1
jax: 0.10.0
libtpu: 0.0.40
codegen_flags: <defaults>
</compile_context>

<pallas_src>
import functools

import jax
import jax.numpy as jnp
from jax.experimental import pallas as pl
from jax.experimental.pallas import tpu as pltpu

LN_EPS = 1e-5  # torch.nn.LayerNorm default


def _ln_relu(h, gamma, beta):
    """Two-pass LayerNorm (biased variance, eps inside rsqrt) + ReLU."""
    mu = jnp.mean(h, axis=-1, keepdims=True)
    c = h - mu
    var = jnp.mean(c * c, axis=-1, keepdims=True)
    hn = c * jax.lax.rsqrt(var + LN_EPS)
    return jnp.maximum(hn * gamma + beta, 0.0)


def decoder_kernel(
    z_ref,
    w1_ref, b1_ref, g1_ref, be1_ref,
    w2_ref, b2_ref, g2_ref, be2_ref,
    w3_ref, b3_ref, g3_ref, be3_ref,
    w4_ref, b4_ref,
    out_ref,
    h3_ref,
):
    bf16 = jnp.bfloat16
    j = pl.program_id(0)  # output-column tile (outer, must stay sequential)
    i = pl.program_id(1)  # batch tile (inner)

    # The hidden trunk is independent of the output-column tile j: compute it
    # once per batch tile on the first j step and cache it in the VMEM scratch
    # indexed by the batch-tile id.  NOTE: correctness relies on the j axis
    # being visited in order with j == 0 first -> keep it "arbitrary".
    @pl.when(j == 0)
    def _():
        h = jnp.dot(z_ref[...], w1_ref[...],
                    preferred_element_type=jnp.float32) + b1_ref[...]
        h = _ln_relu(h, g1_ref[...], be1_ref[...])
        h = jnp.dot(h.astype(bf16), w2_ref[...],
                    preferred_element_type=jnp.float32) + b2_ref[...]
        h = _ln_relu(h, g2_ref[...], be2_ref[...])
        h = jnp.dot(h.astype(bf16), w3_ref[...],
                    preferred_element_type=jnp.float32) + b3_ref[...]
        h = _ln_relu(h, g3_ref[...], be3_ref[...])
        h3_ref[i] = h.astype(h3_ref.dtype)

    # Final projection for this (output-column tile, batch tile).
    out_ref[...] = (
        jnp.dot(h3_ref[i], w4_ref[...], preferred_element_type=jnp.float32)
        + b4_ref[...]
    ).astype(out_ref.dtype)


def _round_up(x, m):
    return (x + m - 1) // m * m


def _vmem_budget_bytes():
    """Generation-aware VMEM cap with headroom for compiler scratch."""
    try:
        cap = pltpu.get_tpu_info().vmem_capacity_bytes
    except Exception:  # conservative fallback (valid on every generation)
        cap = 64 << 20
    return max(min(int(cap * 0.78), cap - (16 << 20)), 32 << 20)


@functools.partial(jax.jit, static_argnums=(2, 3))
def decoder_forward(z, params, size, nx):
    """z: (B, nz) -> (B, nx, size, size)."""
    (w1, b1, g1, be1, w2, b2, g2, be2, w3, b3, g3, be3, w4, b4) = params
    B, nz = z.shape
    nh = w1.shape[1]
    nout = nx * size * size
    bf16 = jnp.bfloat16

    # ---- alignment padding (zeros are numerically a no-op, sliced off later)
    Bp = _round_up(B, 8)          # sublane-aligned batch
    nzp = _round_up(nz, 128)      # lane-aligned K of the first matmul
    noutp = _round_up(nout, 128)  # lane-dense output / w4 tiles

    if Bp != B:
        z = jnp.pad(z, ((0, Bp - B), (0, 0)))
    if nzp != nz:
        z = jnp.pad(z, ((0, 0), (0, nzp - nz)))
        w1 = jnp.pad(w1, ((0, nzp - nz), (0, 0)))
    if noutp != nout:
        w4 = jnp.pad(w4, ((0, 0), (0, noutp - nout)))
        b4 = jnp.pad(b4, ((0, 0), (0, noutp - nout)))

    # bf16 matmul inputs (MXU-native, halves HBM weight + z traffic); biases
    # and LN params stay f32, all matmuls accumulate in f32.
    z = z.astype(bf16)
    w1, w2, w3, w4 = (w.astype(bf16) for w in (w1, w2, w3, w4))

    # ---- tile selection under the generation-aware VMEM budget -------------
    budget = _vmem_budget_bytes()

    def vmem_need(tm, tn):
        n_btiles = Bp // tm
        resident = 2 * ((nzp * nh + 2 * nh * nh) * 2 + 9 * 8 * nh * 4)
        streamed = 2 * (tm * nzp * 2 + nh * tn * 2 + 8 * tn * 4 + tm * tn * 4)
        scratch = n_btiles * max(tm, 16) * nh * 2
        return int((resident + streamed + scratch) * 1.2) + (2 << 20)

    choice = None
    for tm in (512, 256, 128, 64, 32, 16, 8):
        if Bp % tm:
            continue
        for tn in (1024, 512, 256, 128):
            if noutp % tn:
                continue
            if vmem_need(tm, tn) <= budget:
                choice = (tm, tn)
                break
        if choice is not None:
            break
    if choice is None:
        raise ValueError(
            "Decoder weights plus minimal tiles do not fit the VMEM budget; "
            "reduce nh or add a K-tiling axis instead of clamping.")
    TM, TN = choice
    n_btiles = Bp // TM
    grid = (noutp // TN, n_btiles)  # j (output cols) outer, i (batch) inner

    args = (z, w1, b1, g1, be1, w2, b2, g2, be2, w3, b3, g3, be3, w4, b4)

    def const2d(a):  # resident across the whole grid (block index never moves)
        return pl.BlockSpec(a.shape, lambda j, i: (0, 0))

    in_specs = [
        pl.BlockSpec((TM, nzp), lambda j, i: (i, 0)),   # z: per batch tile
        const2d(w1), const2d(b1), const2d(g1), const2d(be1),
        const2d(w2), const2d(b2), const2d(g2), const2d(be2),
        const2d(w3), const2d(b3), const2d(g3), const2d(be3),
        pl.BlockSpec((nh, TN), lambda j, i: (0, j)),    # w4: each tile read ONCE
        pl.BlockSpec((1, TN), lambda j, i: (0, j)),     # b4
    ]
    out_spec = pl.BlockSpec((TM, TN), lambda j, i: (i, j))

    def nbytes(a):
        return a.size * a.dtype.itemsize

    flops = 2 * Bp * (nzp * nh + 2 * nh * nh + nh * noutp)
    bytes_accessed = sum(nbytes(a) for a in args) + Bp * noutp * 4
    cost = pl.CostEstimate(flops=flops, transcendentals=3 * Bp,
                           bytes_accessed=bytes_accessed)

    vmem_limit = min(budget, max(vmem_need(TM, TN), 32 << 20))

    flat = pl.pallas_call(
        decoder_kernel,
        out_shape=jax.ShapeDtypeStruct((Bp, noutp), jnp.float32),
        grid_spec=pltpu.PrefetchScalarGridSpec(
            num_scalar_prefetch=0,
            grid=grid,
            in_specs=in_specs,
            out_specs=out_spec,
            scratch_shapes=[pltpu.VMEM((n_btiles, TM, nh), jnp.bfloat16)],
        ),
        compiler_params=pltpu.CompilerParams(
            # Both axes sequential: the trunk cache requires j == 0 first.
            dimension_semantics=("arbitrary", "arbitrary"),
            vmem_limit_bytes=vmem_limit,
        ),
        cost_estimate=cost,
    )(*args)

    # Strip alignment padding, then nn.Unflatten(1, (nx, size, size)).
    return flat[:B, :nout].reshape(B, nx, size, size)


def init_params(key, nz, nh, nx, size):
    """Deterministic synthetic parameters (weights stored (in, out) so the
    kernel computes x @ W, matching torch's x @ W.T semantics)."""
    nout = nx * size * size
    keys = jax.random.split(key, 8)

    def lin(kw, kb, fan_in, fan_out):
        bound = 1.0 / (fan_in ** 0.5)
        w = jax.random.uniform(kw, (fan_in, fan_out), jnp.float32, -bound, bound)
        b = jax.random.uniform(kb, (1, fan_out), jnp.float32, -bound, bound)
        return w, b

    w1, b1 = lin(keys[0], keys[1], nz, nh)
    w2, b2 = lin(keys[2], keys[3], nh, nh)
    w3, b3 = lin(keys[4], keys[5], nh, nh)
    w4, b4 = lin(keys[6], keys[7], nh, nout)

    ones = lambda: jnp.ones((1, nh), jnp.float32)
    zeros = lambda: jnp.zeros((1, nh), jnp.float32)
    return (w1, b1, ones(), zeros(),
            w2, b2, ones(), zeros(),
            w3, b3, ones(), zeros(),
            w4, b4)


def reference_forward(z, params, size, nx):
    """Pure-JAX reference with the same mixed-precision policy as the kernel
    (bf16 weights / bf16 matmul inputs, f32 accumulation, f32 elementwise)."""
    (w1, b1, g1, be1, w2, b2, g2, be2, w3, b3, g3, be3, w4, b4) = params
    bf16 = jnp.bfloat16
    w1, w2, w3, w4 = (w.astype(bf16) for w in (w1, w2, w3, w4))

    def dot(a, w):
        return jnp.dot(a.astype(bf16), w, preferred_element_type=jnp.float32)

    def ln(h, g, be):
        mu = jnp.mean(h, axis=-1, keepdims=True)
        var = jnp.mean((h - mu) ** 2, axis=-1, keepdims=True)
        return (h - mu) * jax.lax.rsqrt(var + LN_EPS) * g + be

    h = jnp.maximum(ln(dot(z, w1) + b1, g1, be1), 0.0)
    h = jnp.maximum(ln(dot(h, w2) + b2, g2, be2), 0.0)
    h = jnp.maximum(ln(dot(h, w3) + b3, g3, be3), 0.0)
    h = dot(h, w4) + b4
    return h.reshape(z.shape[0], nx, size, size)


if __name__ == "__main__":
    # Small shapes: batch=8, nz=32, nh=128, nx=4, size=8 -> output (8, 4, 8, 8)
    B, nz, nh, nx, size = 8, 32, 128, 4, 8

    key = jax.random.PRNGKey(0)
    k_params, k_z = jax.random.split(key)

    params = init_params(k_params, nz, nh, nx, size)
    z = jax.random.normal(k_z, (B, nz), dtype=jnp.float32)

    out = decoder_forward(z, params, size, nx)
    out = jax.block_until_ready(out)

    ref = reference_forward(z, params, size, nx)
    assert out.shape == (B, nx, size, size)
    max_err = float(jnp.max(jnp.abs(out - ref)))
    assert jnp.allclose(out, ref, atol=1e-2, rtol=1e-2), (
        f"mismatch vs JAX reference (max abs err {max_err})")

    print("KERNEL_OK")
</pallas_src>

<mosaic_0001>
module attributes {stable_mosaic.version = 11 : i64} {
  func.func @decoder_kernel(%arg0: i32, %arg1: i32, %arg2: memref<8x128xbf16, #tpu.memory_space<vmem>>, %arg3: memref<128x128xbf16, #tpu.memory_space<vmem>>, %arg4: memref<1x128xf32, #tpu.memory_space<vmem>>, %arg5: memref<1x128xf32, #tpu.memory_space<vmem>>, %arg6: memref<1x128xf32, #tpu.memory_space<vmem>>, %arg7: memref<128x128xbf16, #tpu.memory_space<vmem>>, %arg8: memref<1x128xf32, #tpu.memory_space<vmem>>, %arg9: memref<1x128xf32, #tpu.memory_space<vmem>>, %arg10: memref<1x128xf32, #tpu.memory_space<vmem>>, %arg11: memref<128x128xbf16, #tpu.memory_space<vmem>>, %arg12: memref<1x128xf32, #tpu.memory_space<vmem>>, %arg13: memref<1x128xf32, #tpu.memory_space<vmem>>, %arg14: memref<1x128xf32, #tpu.memory_space<vmem>>, %arg15: memref<128x256xbf16, #tpu.memory_space<vmem>>, %arg16: memref<1x256xf32, #tpu.memory_space<vmem>>, %arg17: memref<8x256xf32, #tpu.memory_space<vmem>>, %arg18: memref<1x8x128xbf16, #tpu.memory_space<vmem>>) attributes {dimension_semantics = [#tpu.dimension_semantics<arbitrary>, #tpu.dimension_semantics<arbitrary>], iteration_bounds = array<i64: 1, 1>, scalar_prefetch = 0 : i64, scratch_operands = 1 : i64, tpu.core_type = #tpu.core_type<tc>, window_params = [{transform_indices = @transform_0, window_bounds = array<i64: 8, 128>}, {pipeline_mode = #tpu.pipeline_mode<synchronous>, transform_indices = @transform_1, window_bounds = array<i64: 128, 128>}, {pipeline_mode = #tpu.pipeline_mode<synchronous>, transform_indices = @transform_2, window_bounds = array<i64: 1, 128>}, {pipeline_mode = #tpu.pipeline_mode<synchronous>, transform_indices = @transform_3, window_bounds = array<i64: 1, 128>}, {pipeline_mode = #tpu.pipeline_mode<synchronous>, transform_indices = @transform_4, window_bounds = array<i64: 1, 128>}, {pipeline_mode = #tpu.pipeline_mode<synchronous>, transform_indices = @transform_5, window_bounds = array<i64: 128, 128>}, {pipeline_mode = #tpu.pipeline_mode<synchronous>, transform_indices = @transform_6, window_bounds = array<i64: 1, 128>}, {pipeline_mode = #tpu.pipeline_mode<synchronous>, transform_indices = @transform_7, window_bounds = array<i64: 1, 128>}, {pipeline_mode = #tpu.pipeline_mode<synchronous>, transform_indices = @transform_8, window_bounds = array<i64: 1, 128>}, {pipeline_mode = #tpu.pipeline_mode<synchronous>, transform_indices = @transform_9, window_bounds = array<i64: 128, 128>}, {pipeline_mode = #tpu.pipeline_mode<synchronous>, transform_indices = @transform_10, window_bounds = array<i64: 1, 128>}, {pipeline_mode = #tpu.pipeline_mode<synchronous>, transform_indices = @transform_11, window_bounds = array<i64: 1, 128>}, {pipeline_mode = #tpu.pipeline_mode<synchronous>, transform_indices = @transform_12, window_bounds = array<i64: 1, 128>}, {transform_indices = @transform_13, window_bounds = array<i64: 128, 256>}, {transform_indices = @transform_14, window_bounds = array<i64: 1, 256>}, {transform_indices = @transform_15, window_bounds = array<i64: 8, 256>}]} {
    %c0_i32 = arith.constant 0 : i32
    %0 = arith.cmpi eq, %arg0, %c0_i32 : i32
    %1 = arith.extui %0 : i1 to i32
    %c0_i32_0 = arith.constant 0 : i32
    %2 = arith.cmpi ne, %1, %c0_i32_0 : i32
    scf.if %2 {
      %c0_8 = arith.constant 0 : index
      %c0_9 = arith.constant 0 : index
      %12 = vector.load %arg2[%c0_8, %c0_9] : memref<8x128xbf16, #tpu.memory_space<vmem>>, vector<8x128xbf16>
      %c0_10 = arith.constant 0 : index
      %c0_11 = arith.constant 0 : index
      %13 = vector.load %arg3[%c0_10, %c0_11] : memref<128x128xbf16, #tpu.memory_space<vmem>>, vector<128x128xbf16>
      %cst_12 = arith.constant dense<0.000000e+00> : vector<8x128xf32>
      %14 = tpu.matmul %12, %13, %cst_12 {dimension_numbers = #tpu.dot_dimension_numbers<[1], [0], [0], [1], [0, 0, 1, 1], [], []>} : vector<8x128xbf16>, vector<128x128xbf16>, vector<8x128xf32> -> vector<8x128xf32>
      %c0_13 = arith.constant 0 : index
      %c0_14 = arith.constant 0 : index
      %15 = vector.load %arg4[%c0_13, %c0_14] : memref<1x128xf32, #tpu.memory_space<vmem>>, vector<1x128xf32>
      %16 = vector.broadcast %15 : vector<1x128xf32> to vector<8x128xf32>
      %17 = arith.addf %14, %16 : vector<8x128xf32>
      %c0_15 = arith.constant 0 : index
      %c0_16 = arith.constant 0 : index
      %18 = vector.load %arg5[%c0_15, %c0_16] : memref<1x128xf32, #tpu.memory_space<vmem>>, vector<1x128xf32>
      %c0_17 = arith.constant 0 : index
      %c0_18 = arith.constant 0 : index
      %19 = vector.load %arg6[%c0_17, %c0_18] : memref<1x128xf32, #tpu.memory_space<vmem>>, vector<1x128xf32>
      %cst_19 = arith.constant dense<0.000000e+00> : vector<8xf32>
      %20 = vector.multi_reduction <add>, %17, %cst_19 [1] : vector<8x128xf32> to vector<8xf32>
      %21 = vector.shape_cast %20 : vector<8xf32> to vector<8x1xf32>
      %cst_20 = arith.constant 1.280000e+02 : f32
      %22 = vector.broadcast %cst_20 : f32 to vector<8x1xf32>
      %23 = arith.divf %21, %22 : vector<8x1xf32>
      %24 = vector.broadcast %23 : vector<8x1xf32> to vector<8x128xf32>
      %25 = arith.subf %17, %24 : vector<8x128xf32>
      %26 = arith.mulf %25, %25 : vector<8x128xf32>
      %cst_21 = arith.constant dense<0.000000e+00> : vector<8xf32>
      %27 = vector.multi_reduction <add>, %26, %cst_21 [1] : vector<8x128xf32> to vector<8xf32>
      %28 = vector.shape_cast %27 : vector<8xf32> to vector<8x1xf32>
      %cst_22 = arith.constant 1.280000e+02 : f32
      %29 = vector.broadcast %cst_22 : f32 to vector<8x1xf32>
      %30 = arith.divf %28, %29 : vector<8x1xf32>
      %cst_23 = arith.constant 9.99999974E-6 : f32
      %31 = vector.broadcast %cst_23 : f32 to vector<8x1xf32>
      %32 = arith.addf %30, %31 : vector<8x1xf32>
      %33 = math.rsqrt %32 : vector<8x1xf32>
      %34 = vector.broadcast %33 : vector<8x1xf32> to vector<8x128xf32>
      %35 = arith.mulf %25, %34 : vector<8x128xf32>
      %36 = vector.broadcast %18 : vector<1x128xf32> to vector<8x128xf32>
      %37 = arith.mulf %35, %36 : vector<8x128xf32>
      %38 = vector.broadcast %19 : vector<1x128xf32> to vector<8x128xf32>
      %39 = arith.addf %37, %38 : vector<8x128xf32>
      %cst_24 = arith.constant 0.000000e+00 : f32
      %40 = vector.broadcast %cst_24 : f32 to vector<8x128xf32>
      %41 = arith.maximumf %39, %40 : vector<8x128xf32>
      %42 = arith.truncf %41 : vector<8x128xf32> to vector<8x128xbf16>
      %c0_25 = arith.constant 0 : index
      %c0_26 = arith.constant 0 : index
      %43 = vector.load %arg7[%c0_25, %c0_26] : memref<128x128xbf16, #tpu.memory_space<vmem>>, vector<128x128xbf16>
      %cst_27 = arith.constant dense<0.000000e+00> : vector<8x128xf32>
      %44 = tpu.matmul %42, %43, %cst_27 {dimension_numbers = #tpu.dot_dimension_numbers<[1], [0], [0], [1], [0, 0, 1, 1], [], []>} : vector<8x128xbf16>, vector<128x128xbf16>, vector<8x128xf32> -> vector<8x128xf32>
      %c0_28 = arith.constant 0 : index
      %c0_29 = arith.constant 0 : index
      %45 = vector.load %arg8[%c0_28, %c0_29] : memref<1x128xf32, #tpu.memory_space<vmem>>, vector<1x128xf32>
      %46 = vector.broadcast %45 : vector<1x128xf32> to vector<8x128xf32>
      %47 = arith.addf %44, %46 : vector<8x128xf32>
      %c0_30 = arith.constant 0 : index
      %c0_31 = arith.constant 0 : index
      %48 = vector.load %arg9[%c0_30, %c0_31] : memref<1x128xf32, #tpu.memory_space<vmem>>, vector<1x128xf32>
      %c0_32 = arith.constant 0 : index
      %c0_33 = arith.constant 0 : index
      %49 = vector.load %arg10[%c0_32, %c0_33] : memref<1x128xf32, #tpu.memory_space<vmem>>, vector<1x128xf32>
      %cst_34 = arith.constant dense<0.000000e+00> : vector<8xf32>
      %50 = vector.multi_reduction <add>, %47, %cst_34 [1] : vector<8x128xf32> to vector<8xf32>
      %51 = vector.shape_cast %50 : vector<8xf32> to vector<8x1xf32>
      %cst_35 = arith.constant 1.280000e+02 : f32
      %52 = vector.broadcast %cst_35 : f32 to vector<8x1xf32>
      %53 = arith.divf %51, %52 : vector<8x1xf32>
      %54 = vector.broadcast %53 : vector<8x1xf32> to vector<8x128xf32>
      %55 = arith.subf %47, %54 : vector<8x128xf32>
      %56 = arith.mulf %55, %55 : vector<8x128xf32>
      %cst_36 = arith.constant dense<0.000000e+00> : vector<8xf32>
      %57 = vector.multi_reduction <add>, %56, %cst_36 [1] : vector<8x128xf32> to vector<8xf32>
      %58 = vector.shape_cast %57 : vector<8xf32> to vector<8x1xf32>
      %cst_37 = arith.constant 1.280000e+02 : f32
      %59 = vector.broadcast %cst_37 : f32 to vector<8x1xf32>
      %60 = arith.divf %58, %59 : vector<8x1xf32>
      %cst_38 = arith.constant 9.99999974E-6 : f32
      %61 = vector.broadcast %cst_38 : f32 to vector<8x1xf32>
      %62 = arith.addf %60, %61 : vector<8x1xf32>
      %63 = math.rsqrt %62 : vector<8x1xf32>
      %64 = vector.broadcast %63 : vector<8x1xf32> to vector<8x128xf32>
      %65 = arith.mulf %55, %64 : vector<8x128xf32>
      %66 = vector.broadcast %48 : vector<1x128xf32> to vector<8x128xf32>
      %67 = arith.mulf %65, %66 : vector<8x128xf32>
      %68 = vector.broadcast %49 : vector<1x128xf32> to vector<8x128xf32>
      %69 = arith.addf %67, %68 : vector<8x128xf32>
      %cst_39 = arith.constant 0.000000e+00 : f32
      %70 = vector.broadcast %cst_39 : f32 to vector<8x128xf32>
      %71 = arith.maximumf %69, %70 : vector<8x128xf32>
      %72 = arith.truncf %71 : vector<8x128xf32> to vector<8x128xbf16>
      %c0_40 = arith.constant 0 : index
      %c0_41 = arith.constant 0 : index
      %73 = vector.load %arg11[%c0_40, %c0_41] : memref<128x128xbf16, #tpu.memory_space<vmem>>, vector<128x128xbf16>
      %cst_42 = arith.constant dense<0.000000e+00> : vector<8x128xf32>
      %74 = tpu.matmul %72, %73, %cst_42 {dimension_numbers = #tpu.dot_dimension_numbers<[1], [0], [0], [1], [0, 0, 1, 1], [], []>} : vector<8x128xbf16>, vector<128x128xbf16>, vector<8x128xf32> -> vector<8x128xf32>
      %c0_43 = arith.constant 0 : index
      %c0_44 = arith.constant 0 : index
      %75 = vector.load %arg12[%c0_43, %c0_44] : memref<1x128xf32, #tpu.memory_space<vmem>>, vector<1x128xf32>
      %76 = vector.broadcast %75 : vector<1x128xf32> to vector<8x128xf32>
      %77 = arith.addf %74, %76 : vector<8x128xf32>
      %c0_45 = arith.constant 0 : index
      %c0_46 = arith.constant 0 : index
      %78 = vector.load %arg13[%c0_45, %c0_46] : memref<1x128xf32, #tpu.memory_space<vmem>>, vector<1x128xf32>
      %c0_47 = arith.constant 0 : index
      %c0_48 = arith.constant 0 : index
      %79 = vector.load %arg14[%c0_47, %c0_48] : memref<1x128xf32, #tpu.memory_space<vmem>>, vector<1x128xf32>
      %cst_49 = arith.constant dense<0.000000e+00> : vector<8xf32>
      %80 = vector.multi_reduction <add>, %77, %cst_49 [1] : vector<8x128xf32> to vector<8xf32>
      %81 = vector.shape_cast %80 : vector<8xf32> to vector<8x1xf32>
      %cst_50 = arith.constant 1.280000e+02 : f32
      %82 = vector.broadcast %cst_50 : f32 to vector<8x1xf32>
      %83 = arith.divf %81, %82 : vector<8x1xf32>
      %84 = vector.broadcast %83 : vector<8x1xf32> to vector<8x128xf32>
      %85 = arith.subf %77, %84 : vector<8x128xf32>
      %86 = arith.mulf %85, %85 : vector<8x128xf32>
      %cst_51 = arith.constant dense<0.000000e+00> : vector<8xf32>
      %87 = vector.multi_reduction <add>, %86, %cst_51 [1] : vector<8x128xf32> to vector<8xf32>
      %88 = vector.shape_cast %87 : vector<8xf32> to vector<8x1xf32>
      %cst_52 = arith.constant 1.280000e+02 : f32
      %89 = vector.broadcast %cst_52 : f32 to vector<8x1xf32>
      %90 = arith.divf %88, %89 : vector<8x1xf32>
      %cst_53 = arith.constant 9.99999974E-6 : f32
      %91 = vector.broadcast %cst_53 : f32 to vector<8x1xf32>
      %92 = arith.addf %90, %91 : vector<8x1xf32>
      %93 = math.rsqrt %92 : vector<8x1xf32>
      %94 = vector.broadcast %93 : vector<8x1xf32> to vector<8x128xf32>
      %95 = arith.mulf %85, %94 : vector<8x128xf32>
      %96 = vector.broadcast %78 : vector<1x128xf32> to vector<8x128xf32>
      %97 = arith.mulf %95, %96 : vector<8x128xf32>
      %98 = vector.broadcast %79 : vector<1x128xf32> to vector<8x128xf32>
      %99 = arith.addf %97, %98 : vector<8x128xf32>
      %cst_54 = arith.constant 0.000000e+00 : f32
      %100 = vector.broadcast %cst_54 : f32 to vector<8x128xf32>
      %101 = arith.maximumf %99, %100 : vector<8x128xf32>
      %102 = arith.truncf %101 : vector<8x128xf32> to vector<8x128xbf16>
      %103 = arith.index_cast %arg1 : i32 to index
      %c0_55 = arith.constant 0 : index
      %c0_56 = arith.constant 0 : index
      %104 = vector.load %arg18[%103, %c0_55, %c0_56] : memref<1x8x128xbf16, #tpu.memory_space<vmem>>, vector<1x8x128xbf16>
      %105 = vector.shape_cast %104 : vector<1x8x128xbf16> to vector<8x128xbf16>
      %106 = vector.shape_cast %102 : vector<8x128xbf16> to vector<1x8x128xbf16>
      tpu.vector_store %arg18[%103, %c0_55, %c0_56], %106 {strides = array<i32>} : memref<1x8x128xbf16, #tpu.memory_space<vmem>>, vector<1x8x128xbf16>,
    } else {
    }
    %3 = arith.index_cast %arg1 : i32 to index
    %c0 = arith.constant 0 : index
    %c0_1 = arith.constant 0 : index
    %4 = vector.load %arg18[%3, %c0, %c0_1] : memref<1x8x128xbf16, #tpu.memory_space<vmem>>, vector<1x8x128xbf16>
    %5 = vector.shape_cast %4 : vector<1x8x128xbf16> to vector<8x128xbf16>
    %c0_2 = arith.constant 0 : index
    %c0_3 = arith.constant 0 : index
    %6 = vector.load %arg15[%c0_2, %c0_3] : memref<128x256xbf16, #tpu.memory_space<vmem>>, vector<128x256xbf16>
    %cst = arith.constant dense<0.000000e+00> : vector<8x256xf32>
    %7 = tpu.matmul %5, %6, %cst {dimension_numbers = #tpu.dot_dimension_numbers<[1], [0], [0], [1], [0, 0, 1, 1], [], []>} : vector<8x128xbf16>, vector<128x256xbf16>, vector<8x256xf32> -> vector<8x256xf32>
    %c0_4 = arith.constant 0 : index
    %c0_5 = arith.constant 0 : index
    %8 = vector.load %arg16[%c0_4, %c0_5] : memref<1x256xf32, #tpu.memory_space<vmem>>, vector<1x256xf32>
    %9 = vector.broadcast %8 : vector<1x256xf32> to vector<8x256xf32>
    %10 = arith.addf %7, %9 : vector<8x256xf32>
    %c0_6 = arith.constant 0 : index
    %c0_7 = arith.constant 0 : index
    %11 = vector.load %arg17[%c0_6, %c0_7] : memref<8x256xf32, #tpu.memory_space<vmem>>, vector<8x256xf32>
    tpu.vector_store %arg17[%c0_6, %c0_7], %10 {strides = array<i32>} : memref<8x256xf32, #tpu.memory_space<vmem>>, vector<8x256xf32>,
    return
  }
  func.func @transform_0(%arg0: i32, %arg1: i32) -> (i32, i32) {
    %c0_i32 = arith.constant 0 : i32
    %c0_i32_0 = arith.constant 0 : i32
    return %arg1, %c0_i32 : i32, i32
  }
  func.func @transform_1(%arg0: i32, %arg1: i32) -> (i32, i32) {
    %c0_i32 = arith.constant 0 : i32
    %c0_i32_0 = arith.constant 0 : i32
    %c0_i32_1 = arith.constant 0 : i32
    return %c0_i32, %c0_i32_0 : i32, i32
  }
  func.func @transform_2(%arg0: i32, %arg1: i32) -> (i32, i32) {
    %c0_i32 = arith.constant 0 : i32
    %c0_i32_0 = arith.constant 0 : i32
    %c0_i32_1 = arith.constant 0 : i32
    return %c0_i32, %c0_i32_0 : i32, i32
  }
  func.func @transform_3(%arg0: i32, %arg1: i32) -> (i32, i32) {
    %c0_i32 = arith.constant 0 : i32
    %c0_i32_0 = arith.constant 0 : i32
    %c0_i32_1 = arith.constant 0 : i32
    return %c0_i32, %c0_i32_0 : i32, i32
  }
  func.func @transform_4(%arg0: i32, %arg1: i32) -> (i32, i32) {
    %c0_i32 = arith.constant 0 : i32
    %c0_i32_0 = arith.constant 0 : i32
    %c0_i32_1 = arith.constant 0 : i32
    return %c0_i32, %c0_i32_0 : i32, i32
  }
  func.func @transform_5(%arg0: i32, %arg1: i32) -> (i32, i32) {
    %c0_i32 = arith.constant 0 : i32
    %c0_i32_0 = arith.constant 0 : i32
    %c0_i32_1 = arith.constant 0 : i32
    return %c0_i32, %c0_i32_0 : i32, i32
  }
  func.func @transform_6(%arg0: i32, %arg1: i32) -> (i32, i32) {
    %c0_i32 = arith.constant 0 : i32
    %c0_i32_0 = arith.constant 0 : i32
    %c0_i32_1 = arith.constant 0 : i32
    return %c0_i32, %c0_i32_0 : i32, i32
  }
  func.func @transform_7(%arg0: i32, %arg1: i32) -> (i32, i32) {
    %c0_i32 = arith.constant 0 : i32
    %c0_i32_0 = arith.constant 0 : i32
    %c0_i32_1 = arith.constant 0 : i32
    return %c0_i32, %c0_i32_0 : i32, i32
  }
  func.func @transform_8(%arg0: i32, %arg1: i32) -> (i32, i32) {
    %c0_i32 = arith.constant 0 : i32
    %c0_i32_0 = arith.constant 0 : i32
    %c0_i32_1 = arith.constant 0 : i32
    return %c0_i32, %c0_i32_0 : i32, i32
  }
  func.func @transform_9(%arg0: i32, %arg1: i32) -> (i32, i32) {
    %c0_i32 = arith.constant 0 : i32
    %c0_i32_0 = arith.constant 0 : i32
    %c0_i32_1 = arith.constant 0 : i32
    return %c0_i32, %c0_i32_0 : i32, i32
  }
  func.func @transform_10(%arg0: i32, %arg1: i32) -> (i32, i32) {
    %c0_i32 = arith.constant 0 : i32
    %c0_i32_0 = arith.constant 0 : i32
    %c0_i32_1 = arith.constant 0 : i32
    return %c0_i32, %c0_i32_0 : i32, i32
  }
  func.func @transform_11(%arg0: i32, %arg1: i32) -> (i32, i32) {
    %c0_i32 = arith.constant 0 : i32
    %c0_i32_0 = arith.constant 0 : i32
    %c0_i32_1 = arith.constant 0 : i32
    return %c0_i32, %c0_i32_0 : i32, i32
  }
  func.func @transform_12(%arg0: i32, %arg1: i32) -> (i32, i32) {
    %c0_i32 = arith.constant 0 : i32
    %c0_i32_0 = arith.constant 0 : i32
    %c0_i32_1 = arith.constant 0 : i32
    return %c0_i32, %c0_i32_0 : i32, i32
  }
  func.func @transform_13(%arg0: i32, %arg1: i32) -> (i32, i32) {
    %c0_i32 = arith.constant 0 : i32
    %c0_i32_0 = arith.constant 0 : i32
    return %c0_i32, %arg0 : i32, i32
  }
  func.func @transform_14(%arg0: i32, %arg1: i32) -> (i32, i32) {
    %c0_i32 = arith.constant 0 : i32
    %c0_i32_0 = arith.constant 0 : i32
    return %c0_i32, %arg0 : i32, i32
  }
  func.func @transform_15(%arg0: i32, %arg1: i32) -> (i32, i32) {
    %c0_i32 = arith.constant 0 : i32
    return %arg1, %arg0 : i32, i32
  }
}

</mosaic_0001>

<llo_original>
// kernel: decoder_forward.1
$region0: #{decoder_forward.1}
  #allocation0 [shape = 'u32[]', space=smem, size = 0x4, offset = 0x4, fixed_abs, tag = 'smem constant byte address 0x4 - core index']
  #allocation1 [shape = 'u32[144,128]{1,0:T(1,128)}', space=vmem, size = 0x12000, scoped, tag = 'internal scratch']
  #allocation2 [shape = 'bf16[1,8,128]{2,1,0:T(8,128)(2,1)}', space=vmem, size = 0x800, scoped, tag = 'scratch operand']
  %s0 = inlined_call_operand.vmem [shape: bf16[8,128], index: 0, kind: input, shape index: {}]
  %s1 = inlined_call_operand.vmem [shape: bf16[128,128], index: 1, kind: input, shape index: {}]
  %s2 = inlined_call_operand.vmem [shape: f32[1,128], index: 2, kind: input, shape index: {}]
  %s3 = inlined_call_operand.vmem [shape: f32[1,128], index: 3, kind: input, shape index: {}]
  %s4 = inlined_call_operand.vmem [shape: f32[1,128], index: 4, kind: input, shape index: {}]
  %s5 = inlined_call_operand.vmem [shape: bf16[128,128], index: 5, kind: input, shape index: {}]
  %s6 = inlined_call_operand.vmem [shape: f32[1,128], index: 6, kind: input, shape index: {}]
  %s7 = inlined_call_operand.vmem [shape: f32[1,128], index: 7, kind: input, shape index: {}]
  %s8 = inlined_call_operand.vmem [shape: f32[1,128], index: 8, kind: input, shape index: {}]
  %s9 = inlined_call_operand.vmem [shape: bf16[128,128], index: 9, kind: input, shape index: {}]
  %s10 = inlined_call_operand.vmem [shape: f32[1,128], index: 10, kind: input, shape index: {}]
  %s11 = inlined_call_operand.vmem [shape: f32[1,128], index: 11, kind: input, shape index: {}]
  %s12 = inlined_call_operand.vmem [shape: f32[1,128], index: 12, kind: input, shape index: {}]
  %s13 = inlined_call_operand.vmem [shape: bf16[128,256], index: 13, kind: input, shape index: {}]
  %s14 = inlined_call_operand.vmem [shape: f32[1,256], index: 14, kind: input, shape index: {}]
  %s15 = inlined_call_operand.vmem [shape: f32[8,256], index: 15, kind: output, shape index: {}]
  %s16 = sld [smem:[#allocation0]]
  $region74: #{decoder_forward.1} parent=0
    _
  %s18 = ssub.s32 1, %s16
  %s19 = scalar_select 0, %s18, %s16
  // Predicated region
  $region2: #{decoder_forward.1} parent=0 // pred_check
    _
  $region3: #{decoder_forward.1} parent=0 // pred_check_branch
    %21 = sbr.rel (0) target = $region5
  $region4: #{decoder_forward.1} parent=0 // pred_region
    _
  $region5: #{decoder_forward.1} parent=0 // pred_fallthru
    _
  // Predicated region
  $region6: #{decoder_forward.1} parent=0 // pred_check
    _
  $region7: #{decoder_forward.1} parent=0 // pred_check_branch
    %23 = sbr.rel (0) target = $region9
  $region8: #{decoder_forward.1} parent=0 // pred_region
    _
  $region9: #{decoder_forward.1} parent=0 // pred_fallthru
    _
  // Predicated region
  $region10: #{decoder_forward.1} parent=0 // pred_check
    _
  $region11: #{decoder_forward.1} parent=0 // pred_check_branch
    %25 = sbr.rel (0) target = $region13
  $region12: #{decoder_forward.1} parent=0 // pred_region
    _
  $region13: #{decoder_forward.1} parent=0 // pred_fallthru
    _
  // Predicated region
  $region14: #{decoder_forward.1} parent=0 // pred_check
    _
  $region15: #{decoder_forward.1} parent=0 // pred_check_branch
    %27 = sbr.rel (0) target = $region17
  $region16: #{decoder_forward.1} parent=0 // pred_region
    _
  $region17: #{decoder_forward.1} parent=0 // pred_fallthru
    _
  // Predicated region
  $region18: #{decoder_forward.1} parent=0 // pred_check
    _
  $region19: #{decoder_forward.1} parent=0 // pred_check_branch
    %29 = sbr.rel (0) target = $region21
  $region20: #{decoder_forward.1} parent=0 // pred_region
    _
  $region21: #{decoder_forward.1} parent=0 // pred_fallthru
    _
  // Predicated region
  $region22: #{decoder_forward.1} parent=0 // pred_check
    _
  $region23: #{decoder_forward.1} parent=0 // pred_check_branch
    %31 = sbr.rel (0) target = $region25
  $region24: #{decoder_forward.1} parent=0 // pred_region
    _
  $region25: #{decoder_forward.1} parent=0 // pred_fallthru
    _
  // Predicated region
  $region26: #{decoder_forward.1} parent=0 // pred_check
    _
  $region27: #{decoder_forward.1} parent=0 // pred_check_branch
    %33 = sbr.rel (0) target = $region29
  $region28: #{decoder_forward.1} parent=0 // pred_region
    _
  $region29: #{decoder_forward.1} parent=0 // pred_fallthru
    _
  // Predicated region
  $region30: #{decoder_forward.1} parent=0 // pred_check
    _
  $region31: #{decoder_forward.1} parent=0 // pred_check_branch
    %35 = sbr.rel (0) target = $region33
  $region32: #{decoder_forward.1} parent=0 // pred_region
    _
  $region33: #{decoder_forward.1} parent=0 // pred_fallthru
    _
  // Predicated region
  $region34: #{decoder_forward.1} parent=0 // pred_check
    _
  $region35: #{decoder_forward.1} parent=0 // pred_check_branch
    %37 = sbr.rel (0) target = $region37
  $region36: #{decoder_forward.1} parent=0 // pred_region
    _
  $region37: #{decoder_forward.1} parent=0 // pred_fallthru
    _
  // Predicated region
  $region38: #{decoder_forward.1} parent=0 // pred_check
    _
  $region39: #{decoder_forward.1} parent=0 // pred_check_branch
    %39 = sbr.rel (0) target = $region41
  $region40: #{decoder_forward.1} parent=0 // pred_region
    _
  $region41: #{decoder_forward.1} parent=0 // pred_fallthru
    _
  // Predicated region
  $region42: #{decoder_forward.1} parent=0 // pred_check
    _
  $region43: #{decoder_forward.1} parent=0 // pred_check_branch
    %41 = sbr.rel (0) target = $region45
  $region44: #{decoder_forward.1} parent=0 // pred_region
    _
  $region45: #{decoder_forward.1} parent=0 // pred_fallthru
    _
  // Predicated region
  $region46: #{decoder_forward.1} parent=0 // pred_check
    _
  $region47: #{decoder_forward.1} parent=0 // pred_check_branch
    %43 = sbr.rel (0) target = $region49
  $region48: #{decoder_forward.1} parent=0 // pred_region
    _
  $region49: #{decoder_forward.1} parent=0 // pred_fallthru
    _
  // Predicated region
  $region50: #{decoder_forward.1} parent=0 // pred_check
    _
  $region51: #{decoder_forward.1} parent=0 // pred_check_branch
    %45 = sbr.rel (0) target = $region53
  $region52: #{decoder_forward.1} parent=0 // pred_region
    _
  $region53: #{decoder_forward.1} parent=0 // pred_fallthru
    _
  // Predicated region
  $region54: #{decoder_forward.1} parent=0 // pred_check
    _
  $region55: #{decoder_forward.1} parent=0 // pred_check_branch
    %47 = sbr.rel (0) target = $region57
  $region56: #{decoder_forward.1} parent=0 // pred_region
    _
  $region57: #{decoder_forward.1} parent=0 // pred_fallthru
    _
  // Predicated region
  $region58: #{decoder_forward.1} parent=0 // pred_check
    _
  $region59: #{decoder_forward.1} parent=0 // pred_check_branch
    %49 = sbr.rel (0) target = $region61
  $region60: #{decoder_forward.1} parent=0 // pred_region
    _
  $region61: #{decoder_forward.1} parent=0 // pred_fallthru
    _
  %p51 = scmp.eq.s32.totalorder 0, 0
  // Predicated region
  $region62: #{decoder_forward.1} parent=0 // pred_check
    %p52 = pneg %p51
  $region63: #{decoder_forward.1} parent=0 // pred_check_branch
    %54 = sbr.rel (%p52) target = $region65
  $region64: #{decoder_forward.1} parent=0 // pred_region
    %v55 = vld [vmem:[%s0] sm:$0xf]
    %v56 = vld [vmem:[%s1] sm:$0xf]
    %v57 = vld [vmem:[%s1 + $0x4] sm:$0xf]
    %v58 = vld [vmem:[%s1 + $0x8] sm:$0xf]
    %v59 = vld [vmem:[%s1 + $0xc] sm:$0xf]
    %v60 = vld [vmem:[%s1 + $0x10] sm:$0xf]
    %v61 = vld [vmem:[%s1 + $0x14] sm:$0xf]
    %v62 = vld [vmem:[%s1 + $0x18] sm:$0xf]
    %v63 = vld [vmem:[%s1 + $0x1c] sm:$0xf]
    %v64 = vld [vmem:[%s1 + $0x20] sm:$0xf]
    %v65 = vld [vmem:[%s1 + $0x24] sm:$0xf]
    %v66 = vld [vmem:[%s1 + $0x28] sm:$0xf]
    %v67 = vld [vmem:[%s1 + $0x2c] sm:$0xf]
    %v68 = vld [vmem:[%s1 + $0x30] sm:$0xf]
    %v69 = vld [vmem:[%s1 + $0x34] sm:$0xf]
    %v70 = vld [vmem:[%s1 + $0x38] sm:$0xf]
    %v71 = vld [vmem:[%s1 + $0x3c] sm:$0xf]
    %v72 = vld [vmem:[%s2] sm:$0x1]
    %v74 = vlaneseq
    %v75 = vshrl.u32 %v74, 7
    %v76 = vsub.s32 0, %v75
    %v77 = vrot.slane %v72, %v76
    %v95 = vunpack.c.l.b16 %v56
    %v96 = vunpack.c.l.b16 %v57
    %v97 = vunpack.c.l.b16 %v58
    %v98 = vunpack.c.l.b16 %v59
    %v99 = vunpack.c.l.b16 %v60
    %v100 = vunpack.c.l.b16 %v61
    %v101 = vunpack.c.l.b16 %v62
    %v102 = vunpack.c.l.b16 %v63
    %v103 = vunpack.c.l.b16 %v64
    %v104 = vunpack.c.l.b16 %v65
    %v105 = vunpack.c.l.b16 %v66
    %v106 = vunpack.c.l.b16 %v67
    %v107 = vunpack.c.l.b16 %v68
    %v108 = vunpack.c.l.b16 %v69
    %v109 = vunpack.c.l.b16 %v70
    %v110 = vunpack.c.l.b16 %v71
    %v111 = vpack.c.b16 %v96, %v95
    %v112 = vpack.c.b16 %v98, %v97
    %v113 = vpack.c.b16 %v100, %v99
    %v114 = vpack.c.b16 %v102, %v101
    %v115 = vpack.c.b16 %v104, %v103
    %v116 = vpack.c.b16 %v106, %v105
    %v117 = vpack.c.b16 %v108, %v107
    %v118 = vpack.c.b16 %v110, %v109
    %127 = vmatprep.subr.bf16.mxu0 0
    %128 = vmatpush1.bf16.msra.mxu0 %v111
    %129 = vmatprep.subr.bf16.mxu0 0
    %130 = vmatpush1.bf16.msra.mxu0 %v112
    %131 = vmatprep.subr.bf16.mxu0 0
    %132 = vmatpush1.bf16.msra.mxu0 %v113
    %133 = vmatprep.subr.bf16.mxu0 0
    %134 = vmatpush1.bf16.msra.mxu0 %v114
    %135 = vmatprep.subr.bf16.mxu0 0
    %136 = vmatpush1.bf16.msra.mxu0 %v115
    %137 = vmatprep.subr.bf16.mxu0 0
    %138 = vmatpush1.bf16.msra.mxu0 %v116
    %139 = vmatprep.subr.bf16.mxu0 0
    %140 = vmatpush1.bf16.msra.mxu0 %v117
    %141 = vmatprep.subr.bf16.mxu0 0
    %142 = vmatpush1.bf16.msra.mxu0 %v118
    %143 = vmatprep.subr.bf16.mxu0 0
    %144 = vmatpush1.bf16.msra.mxu0 0
    %145 = vmatprep.subr.bf16.mxu0 0
    %146 = vmatpush1.bf16.msra.mxu0 0
    %147 = vmatprep.subr.bf16.mxu0 0
    %148 = vmatpush1.bf16.msra.mxu0 0
    %149 = vmatprep.subr.bf16.mxu0 0
    %150 = vmatpush1.bf16.msra.mxu0 0
    %151 = vmatprep.subr.bf16.mxu0 0
    %152 = vmatpush1.bf16.msra.mxu0 0
    %153 = vmatprep.subr.bf16.mxu0 0
    %154 = vmatpush1.bf16.msra.mxu0 0
    %155 = vmatprep.subr.bf16.mxu0 0
    %156 = vmatpush1.bf16.msra.mxu0 0
    %157 = vmatprep.subr.bf16.mxu0 0
    %158 = vmatpush1.bf16.msra.mxu0 0
    %159 = vmatprep.mubr.bf16.mxu0 0
    %160 = vmatmul.mubr.bf16.gmra.mrb[0].mxu0 %v55
    %v161 = vpop.f32.mrb[0].mxu0
    %v162 = vadd.f32 %v77, %v161
    %v163 = vpop.f32.mrb[0].mxu0
    %v164 = vpop.f32.mrb[0].mxu0
    %v165 = vpop.f32.mrb[0].mxu0
    %166 = vdwg.mxu0
    %v167 = vld [vmem:[%s3] sm:$0x1]
    %v168 = vld [vmem:[%s4] sm:$0x1]
    %169 = vadd.xlane.f32.xlu0 %v162
    %v170 = vpop.xlane.xlu0 %169
    %v171 = vrcp.pop 128.0
    %v172 = vmul.f32 %v170, %v171
    %v173 = vsub.f32 %v162, %v172
    %v174 = vmul.f32 %v173, %v173
    %175 = vadd.xlane.f32.xlu0 %v174
    %v176 = vpop.xlane.xlu0 %175
    %v177 = vmul.f32 %v176, %v171
    %v178 = vadd.f32 %v177, 1e-05
    %v179 = vrsqrt.pop %v178
    %v180 = vmul.f32 %v173, %v179
    %v182 = vlaneseq
    %v183 = vshrl.u32 %v182, 7
    %v184 = vsub.s32 0, %v183
    %v185 = vrot.slane %v167, %v184
    %v187 = vmul.f32 %v180, %v185
    %v189 = vlaneseq
    %v190 = vshrl.u32 %v189, 7
    %v191 = vsub.s32 0, %v190
    %v192 = vrot.slane %v168, %v191
    %v194 = vadd.f32 %v187, %v192
    %v195 = vmax.f32 %v194, 0.0
    %v196 = vpack.c.bf16 %v195, %v195
    %v197 = vld [vmem:[%s5] sm:$0xf]
    %v198 = vld [vmem:[%s5 + $0x4] sm:$0xf]
    %v199 = vld [vmem:[%s5 + $0x8] sm:$0xf]
    %v200 = vld [vmem:[%s5 + $0xc] sm:$0xf]
    %v201 = vld [vmem:[%s5 + $0x10] sm:$0xf]
    %v202 = vld [vmem:[%s5 + $0x14] sm:$0xf]
    %v203 = vld [vmem:[%s5 + $0x18] sm:$0xf]
    %v204 = vld [vmem:[%s5 + $0x1c] sm:$0xf]
    %v205 = vld [vmem:[%s5 + $0x20] sm:$0xf]
    %v206 = vld [vmem:[%s5 + $0x24] sm:$0xf]
    %v207 = vld [vmem:[%s5 + $0x28] sm:$0xf]
    %v208 = vld [vmem:[%s5 + $0x2c] sm:$0xf]
    %v209 = vld [vmem:[%s5 + $0x30] sm:$0xf]
    %v210 = vld [vmem:[%s5 + $0x34] sm:$0xf]
    %v211 = vld [vmem:[%s5 + $0x38] sm:$0xf]
    %v212 = vld [vmem:[%s5 + $0x3c] sm:$0xf]
    %v213 = vld [vmem:[%s6] sm:$0x1]
    %v215 = vlaneseq
    %v216 = vshrl.u32 %v215, 7
    %v217 = vsub.s32 0, %v216
    %v218 = vrot.slane %v213, %v217
    %v236 = vunpack.c.l.b16 %v197
    %v237 = vunpack.c.l.b16 %v198
    %v238 = vunpack.c.l.b16 %v199
    %v239 = vunpack.c.l.b16 %v200
    %v240 = vunpack.c.l.b16 %v201
    %v241 = vunpack.c.l.b16 %v202
    %v242 = vunpack.c.l.b16 %v203
    %v243 = vunpack.c.l.b16 %v204
    %v244 = vunpack.c.l.b16 %v205
    %v245 = vunpack.c.l.b16 %v206
    %v246 = vunpack.c.l.b16 %v207
    %v247 = vunpack.c.l.b16 %v208
    %v248 = vunpack.c.l.b16 %v209
    %v249 = vunpack.c.l.b16 %v210
    %v250 = vunpack.c.l.b16 %v211
    %v251 = vunpack.c.l.b16 %v212
    %v252 = vpack.c.b16 %v237, %v236
    %v253 = vpack.c.b16 %v239, %v238
    %v254 = vpack.c.b16 %v241, %v240
    %v255 = vpack.c.b16 %v243, %v242
    %v256 = vpack.c.b16 %v245, %v244
    %v257 = vpack.c.b16 %v247, %v246
    %v258 = vpack.c.b16 %v249, %v248
    %v259 = vpack.c.b16 %v251, %v250
    %268 = vmatprep.subr.bf16.mxu0 0
    %269 = vmatpush1.bf16.msra.mxu0 %v252
    %270 = vmatprep.subr.bf16.mxu0 0
    %271 = vmatpush1.bf16.msra.mxu0 %v253
    %272 = vmatprep.subr.bf16.mxu0 0
    %273 = vmatpush1.bf16.msra.mxu0 %v254
    %274 = vmatprep.subr.bf16.mxu0 0
    %275 = vmatpush1.bf16.msra.mxu0 %v255
    %276 = vmatprep.subr.bf16.mxu0 0
    %277 = vmatpush1.bf16.msra.mxu0 %v256
    %278 = vmatprep.subr.bf16.mxu0 0
    %279 = vmatpush1.bf16.msra.mxu0 %v257
    %280 = vmatprep.subr.bf16.mxu0 0
    %281 = vmatpush1.bf16.msra.mxu0 %v258
    %282 = vmatprep.subr.bf16.mxu0 0
    %283 = vmatpush1.bf16.msra.mxu0 %v259
    %284 = vmatprep.subr.bf16.mxu0 0
    %285 = vmatpush1.bf16.msra.mxu0 0
    %286 = vmatprep.subr.bf16.mxu0 0
    %287 = vmatpush1.bf16.msra.mxu0 0
    %288 = vmatprep.subr.bf16.mxu0 0
    %289 = vmatpush1.bf16.msra.mxu0 0
    %290 = vmatprep.subr.bf16.mxu0 0
    %291 = vmatpush1.bf16.msra.mxu0 0
    %292 = vmatprep.subr.bf16.mxu0 0
    %293 = vmatpush1.bf16.msra.mxu0 0
    %294 = vmatprep.subr.bf16.mxu0 0
    %295 = vmatpush1.bf16.msra.mxu0 0
    %296 = vmatprep.subr.bf16.mxu0 0
    %297 = vmatpush1.bf16.msra.mxu0 0
    %298 = vmatprep.subr.bf16.mxu0 0
    %299 = vmatpush1.bf16.msra.mxu0 0
    %300 = vmatprep.mubr.bf16.mxu0 0
    %301 = vmatmul.mubr.bf16.gmra.mrb[0].mxu0 %v196
    %v302 = vpop.f32.mrb[0].mxu0
    %v303 = vadd.f32 %v218, %v302
    %v304 = vpop.f32.mrb[0].mxu0
    %v305 = vpop.f32.mrb[0].mxu0
    %v306 = vpop.f32.mrb[0].mxu0
    %307 = vdwg.mxu0
    %v308 = vld [vmem:[%s7] sm:$0x1]
    %v309 = vld [vmem:[%s8] sm:$0x1]
    %310 = vadd.xlane.f32.xlu0 %v303
    %v311 = vpop.xlane.xlu0 %310
    %v312 = vmul.f32 %v311, %v171
    %v313 = vsub.f32 %v303, %v312
    %v314 = vmul.f32 %v313, %v313
    %315 = vadd.xlane.f32.xlu0 %v314
    %v316 = vpop.xlane.xlu0 %315
    %v317 = vmul.f32 %v316, %v171
    %v318 = vadd.f32 %v317, 1e-05
    %v319 = vrsqrt.pop %v318
    %v320 = vmul.f32 %v313, %v319
    %v322 = vlaneseq
    %v323 = vshrl.u32 %v322, 7
    %v324 = vsub.s32 0, %v323
    %v325 = vrot.slane %v308, %v324
    %v327 = vmul.f32 %v320, %v325
    %v329 = vlaneseq
    %v330 = vshrl.u32 %v329, 7
    %v331 = vsub.s32 0, %v330
    %v332 = vrot.slane %v309, %v331
    %v334 = vadd.f32 %v327, %v332
    %v335 = vmax.f32 %v334, 0.0
    %v336 = vpack.c.bf16 %v335, %v335
    %v337 = vld [vmem:[%s9] sm:$0xf]
    %v338 = vld [vmem:[%s9 + $0x4] sm:$0xf]
    %v339 = vld [vmem:[%s9 + $0x8] sm:$0xf]
    %v340 = vld [vmem:[%s9 + $0xc] sm:$0xf]
    %v341 = vld [vmem:[%s9 + $0x10] sm:$0xf]
    %v342 = vld [vmem:[%s9 + $0x14] sm:$0xf]
    %v343 = vld [vmem:[%s9 + $0x18] sm:$0xf]
    %v344 = vld [vmem:[%s9 + $0x1c] sm:$0xf]
    %v345 = vld [vmem:[%s9 + $0x20] sm:$0xf]
    %v346 = vld [vmem:[%s9 + $0x24] sm:$0xf]
    %v347 = vld [vmem:[%s9 + $0x28] sm:$0xf]
    %v348 = vld [vmem:[%s9 + $0x2c] sm:$0xf]
    %v349 = vld [vmem:[%s9 + $0x30] sm:$0xf]
    %v350 = vld [vmem:[%s9 + $0x34] sm:$0xf]
    %v351 = vld [vmem:[%s9 + $0x38] sm:$0xf]
    %v352 = vld [vmem:[%s9 + $0x3c] sm:$0xf]
    %v353 = vld [vmem:[%s10] sm:$0x1]
    %v355 = vlaneseq
    %v356 = vshrl.u32 %v355, 7
    %v357 = vsub.s32 0, %v356
    %v358 = vrot.slane %v353, %v357
    %v376 = vunpack.c.l.b16 %v337
    %v377 = vunpack.c.l.b16 %v338
    %v378 = vunpack.c.l.b16 %v339
    %v379 = vunpack.c.l.b16 %v340
    %v380 = vunpack.c.l.b16 %v341
    %v381 = vunpack.c.l.b16 %v342
    %v382 = vunpack.c.l.b16 %v343
    %v383 = vunpack.c.l.b16 %v344
    %v384 = vunpack.c.l.b16 %v345
    %v385 = vunpack.c.l.b16 %v346
    %v386 = vunpack.c.l.b16 %v347
    %v387 = vunpack.c.l.b16 %v348
    %v388 = vunpack.c.l.b16 %v349
    %v389 = vunpack.c.l.b16 %v350
    %v390 = vunpack.c.l.b16 %v351
    %v391 = vunpack.c.l.b16 %v352
    %v392 = vpack.c.b16 %v377, %v376
    %v393 = vpack.c.b16 %v379, %v378
    %v394 = vpack.c.b16 %v381, %v380
    %v395 = vpack.c.b16 %v383, %v382
    %v396 = vpack.c.b16 %v385, %v384
    %v397 = vpack.c.b16 %v387, %v386
    %v398 = vpack.c.b16 %v389, %v388
    %v399 = vpack.c.b16 %v391, %v390
    %408 = vmatprep.subr.bf16.mxu0 0
    %409 = vmatpush1.bf16.msra.mxu0 %v392
    %410 = vmatprep.subr.bf16.mxu0 0
    %411 = vmatpush1.bf16.msra.mxu0 %v393
    %412 = vmatprep.subr.bf16.mxu0 0
    %413 = vmatpush1.bf16.msra.mxu0 %v394
    %414 = vmatprep.subr.bf16.mxu0 0
    %415 = vmatpush1.bf16.msra.mxu0 %v395
    %416 = vmatprep.subr.bf16.mxu0 0
    %417 = vmatpush1.bf16.msra.mxu0 %v396
    %418 = vmatprep.subr.bf16.mxu0 0
    %419 = vmatpush1.bf16.msra.mxu0 %v397
    %420 = vmatprep.subr.bf16.mxu0 0
    %421 = vmatpush1.bf16.msra.mxu0 %v398
    %422 = vmatprep.subr.bf16.mxu0 0
    %423 = vmatpush1.bf16.msra.mxu0 %v399
    %424 = vmatprep.subr.bf16.mxu0 0
    %425 = vmatpush1.bf16.msra.mxu0 0
    %426 = vmatprep.subr.bf16.mxu0 0
    %427 = vmatpush1.bf16.msra.mxu0 0
    %428 = vmatprep.subr.bf16.mxu0 0
    %429 = vmatpush1.bf16.msra.mxu0 0
    %430 = vmatprep.subr.bf16.mxu0 0
    %431 = vmatpush1.bf16.msra.mxu0 0
    %432 = vmatprep.subr.bf16.mxu0 0
    %433 = vmatpush1.bf16.msra.mxu0 0
    %434 = vmatprep.subr.bf16.mxu0 0
    %435 = vmatpush1.bf16.msra.mxu0 0
    %436 = vmatprep.subr.bf16.mxu0 0
    %437 = vmatpush1.bf16.msra.mxu0 0
    %438 = vmatprep.subr.bf16.mxu0 0
    %439 = vmatpush1.bf16.msra.mxu0 0
    %440 = vmatprep.mubr.bf16.mxu0 0
    %441 = vmatmul.mubr.bf16.gmra.mrb[0].mxu0 %v336
    %v442 = vpop.f32.mrb[0].mxu0
    %v443 = vadd.f32 %v358, %v442
    %v444 = vpop.f32.mrb[0].mxu0
    %v445 = vpop.f32.mrb[0].mxu0
    %v446 = vpop.f32.mrb[0].mxu0
    %447 = vdwg.mxu0
    %v448 = vld [vmem:[%s11] sm:$0x1]
    %v449 = vld [vmem:[%s12] sm:$0x1]
    %450 = vadd.xlane.f32.xlu0 %v443
    %v451 = vpop.xlane.xlu0 %450
    %v452 = vmul.f32 %v451, %v171
    %v453 = vsub.f32 %v443, %v452
    %v454 = vmul.f32 %v453, %v453
    %455 = vadd.xlane.f32.xlu0 %v454
    %v456 = vpop.xlane.xlu0 %455
    %v457 = vmul.f32 %v456, %v171
    %v458 = vadd.f32 %v457, 1e-05
    %v459 = vrsqrt.pop %v458
    %v460 = vmul.f32 %v453, %v459
    %v462 = vlaneseq
    %v463 = vshrl.u32 %v462, 7
    %v464 = vsub.s32 0, %v463
    %v465 = vrot.slane %v448, %v464
    %v467 = vmul.f32 %v460, %v465
    %v469 = vlaneseq
    %v470 = vshrl.u32 %v469, 7
    %v471 = vsub.s32 0, %v470
    %v472 = vrot.slane %v449, %v471
    %v474 = vadd.f32 %v467, %v472
    %v475 = vmax.f32 %v474, 0.0
    %v476 = vpack.c.bf16 %v475, %v475
    %477 = vst [vmem:[#allocation2] sm:$0xf] %v476
  $region65: #{decoder_forward.1} parent=0 // pred_fallthru
    _
  %v478 = vld [vmem:[#allocation2] sm:$0xf]
  %v479 = vld [vmem:[%s13] sm:$0xff]
  %v480 = vld [vmem:[%s13 + $0x8] sm:$0xff]
  %v481 = vld [vmem:[%s13 + $0x10] sm:$0xff]
  %v482 = vld [vmem:[%s13 + $0x18] sm:$0xff]
  %v483 = vld [vmem:[%s13 + $0x20] sm:$0xff]
  %v484 = vld [vmem:[%s13 + $0x28] sm:$0xff]
  %v485 = vld [vmem:[%s13 + $0x30] sm:$0xff]
  %v486 = vld [vmem:[%s13 + $0x38] sm:$0xff]
  %v487 = vld [vmem:[%s13 + $0x40] sm:$0xff]
  %v488 = vld [vmem:[%s13 + $0x48] sm:$0xff]
  %v489 = vld [vmem:[%s13 + $0x50] sm:$0xff]
  %v490 = vld [vmem:[%s13 + $0x58] sm:$0xff]
  %v491 = vld [vmem:[%s13 + $0x60] sm:$0xff]
  %v492 = vld [vmem:[%s13 + $0x68] sm:$0xff]
  %v493 = vld [vmem:[%s13 + $0x70] sm:$0xff]
  %v494 = vld [vmem:[%s13 + $0x78] sm:$0xff]
  %v495 = vld [vmem:[%s14] sm:$0x3]
  %v497 = vlaneseq
  %v498 = vshrl.u32 %v497, 7
  %v499 = vsub.s32 0, %v498
  %v500 = vrot.slane %v495, %v499
  %v501 = vlaneseq
  %v502 = vshrl.u32 %v501, 7
  %v503 = vsub.s32 1, %v502
  %v504 = vrot.slane %v495, %v503
  %v523 = vunpack.c.l.b16 %v479
  %v524 = vunpack.c.h.b16 %v479
  %v525 = vunpack.c.l.b16 %v480
  %v526 = vunpack.c.h.b16 %v480
  %v527 = vunpack.c.l.b16 %v481
  %v528 = vunpack.c.h.b16 %v481
  %v529 = vunpack.c.l.b16 %v482
  %v530 = vunpack.c.h.b16 %v482
  %v531 = vunpack.c.l.b16 %v483
  %v532 = vunpack.c.h.b16 %v483
  %v533 = vunpack.c.l.b16 %v484
  %v534 = vunpack.c.h.b16 %v484
  %v535 = vunpack.c.l.b16 %v485
  %v536 = vunpack.c.h.b16 %v485
  %v537 = vunpack.c.l.b16 %v486
  %v538 = vunpack.c.h.b16 %v486
  %v539 = vunpack.c.l.b16 %v487
  %v540 = vunpack.c.h.b16 %v487
  %v541 = vunpack.c.l.b16 %v488
  %v542 = vunpack.c.h.b16 %v488
  %v543 = vunpack.c.l.b16 %v489
  %v544 = vunpack.c.h.b16 %v489
  %v545 = vunpack.c.l.b16 %v490
  %v546 = vunpack.c.h.b16 %v490
  %v547 = vunpack.c.l.b16 %v491
  %v548 = vunpack.c.h.b16 %v491
  %v549 = vunpack.c.l.b16 %v492
  %v550 = vunpack.c.h.b16 %v492
  %v551 = vunpack.c.l.b16 %v493
  %v552 = vunpack.c.h.b16 %v493
  %v553 = vunpack.c.l.b16 %v494
  %v554 = vunpack.c.h.b16 %v494
  %v555 = vpack.c.b16 %v525, %v523
  %v556 = vpack.c.b16 %v526, %v524
  %v557 = vpack.c.b16 %v529, %v527
  %v558 = vpack.c.b16 %v530, %v528
  %v559 = vpack.c.b16 %v533, %v531
  %v560 = vpack.c.b16 %v534, %v532
  %v561 = vpack.c.b16 %v537, %v535
  %v562 = vpack.c.b16 %v538, %v536
  %v563 = vpack.c.b16 %v541, %v539
  %v564 = vpack.c.b16 %v542, %v540
  %v565 = vpack.c.b16 %v545, %v543
  %v566 = vpack.c.b16 %v546, %v544
  %v567 = vpack.c.b16 %v549, %v547
  %v568 = vpack.c.b16 %v550, %v548
  %v569 = vpack.c.b16 %v553, %v551
  %v570 = vpack.c.b16 %v554, %v552
  %587 = vmatprep.subr.bf16.mxu0 %v556
  %588 = vmatpush1.bf16.msra.mxu0 %v555
  %589 = vmatprep.subr.bf16.mxu0 %v558
  %590 = vmatpush1.bf16.msra.mxu0 %v557
  %591 = vmatprep.subr.bf16.mxu0 %v560
  %592 = vmatpush1.bf16.msra.mxu0 %v559
  %593 = vmatprep.subr.bf16.mxu0 %v562
  %594 = vmatpush1.bf16.msra.mxu0 %v561
  %595 = vmatprep.subr.bf16.mxu0 %v564
  %596 = vmatpush1.bf16.msra.mxu0 %v563
  %597 = vmatprep.subr.bf16.mxu0 %v566
  %598 = vmatpush1.bf16.msra.mxu0 %v565
  %599 = vmatprep.subr.bf16.mxu0 %v568
  %600 = vmatpush1.bf16.msra.mxu0 %v567
  %601 = vmatprep.subr.bf16.mxu0 %v570
  %602 = vmatpush1.bf16.msra.mxu0 %v569
  %603 = vmatprep.subr.bf16.mxu0 0
  %604 = vmatpush1.bf16.msra.mxu0 0
  %605 = vmatprep.subr.bf16.mxu0 0
  %606 = vmatpush1.bf16.msra.mxu0 0
  %607 = vmatprep.subr.bf16.mxu0 0
  %608 = vmatpush1.bf16.msra.mxu0 0
  %609 = vmatprep.subr.bf16.mxu0 0
  %610 = vmatpush1.bf16.msra.mxu0 0
  %611 = vmatprep.subr.bf16.mxu0 0
  %612 = vmatpush1.bf16.msra.mxu0 0
  %613 = vmatprep.subr.bf16.mxu0 0
  %614 = vmatpush1.bf16.msra.mxu0 0
  %615 = vmatprep.subr.bf16.mxu0 0
  %616 = vmatpush1.bf16.msra.mxu0 0
  %617 = vmatprep.subr.bf16.mxu0 0
  %618 = vmatpush1.bf16.msra.mxu0 0
  %619 = vmatprep.mubr.bf16.mxu0 0
  %620 = vmatmul.mubr.bf16.gmra.mrb[0].mxu0 %v478
  %v621 = vpop.f32.mrb[0].mxu0
  %v622 = vadd.f32 %v500, %v621
  %v623 = vpop.f32.mrb[0].mxu0
  %v624 = vadd.f32 %v504, %v623
  %v625 = vpop.f32.mrb[0].mxu0
  %v626 = vpop.f32.mrb[0].mxu0
  %627 = vdwg.mxu0
  %628 = vst [vmem:[%s15] sm:$0xff] %v622
  %629 = vst [vmem:[%s15 + $0x8] sm:$0xff] %v624
  // Predicated region
  $region66: #{decoder_forward.1} parent=0 // pred_check
    _
  $region67: #{decoder_forward.1} parent=0 // pred_check_branch
    %631 = sbr.rel (0) target = $region69
  $region68: #{decoder_forward.1} parent=0 // pred_region
    _
  $region69: #{decoder_forward.1} parent=0 // pred_fallthru
    _
  // Predicated region
  $region70: #{decoder_forward.1} parent=0 // pred_check
    _
  $region71: #{decoder_forward.1} parent=0 // pred_check_branch
    %633 = sbr.rel (0) target = $region73
  $region72: #{decoder_forward.1} parent=0 // pred_region
    _
  $region73: #{decoder_forward.1} parent=0 // pred_fallthru
    _

</llo_original>
